<compile_context>
chip_gen: v6e
topology: v6e:2x2x1
jax: 0.10.0
libtpu: 0.0.40
codegen_flags: <defaults>
</compile_context>

<pallas_src>
import functools

import jax
import jax.numpy as jnp
import numpy as np
from jax.experimental import pallas as pl
from jax.experimental.pallas import tpu as pltpu


# ----------------------------------------------------------------------------
# Plain-JAX STFT glue (mirrors speechbrain STFT defaults: center=True,
# pad_mode="constant", normalized_stft=False, onesided=True, periodic hamming
# window).  The FFT itself has no Pallas TPU primitive.
# ----------------------------------------------------------------------------
def stft_jax(x, sample_rate, win_length_ms=25, hop_length_ms=10, n_fft=400):
    win_length = int(round(sample_rate / 1000.0 * win_length_ms))
    hop_length = int(round(sample_rate / 1000.0 * hop_length_ms))
    assert win_length <= n_fft

    n = jnp.arange(win_length, dtype=jnp.float32)
    window = 0.54 - 0.46 * jnp.cos(2.0 * jnp.pi * n / win_length)
    left = (n_fft - win_length) // 2
    window = jnp.pad(window, (left, n_fft - win_length - left))

    pad = n_fft // 2
    xp = jnp.pad(x, ((0, 0), (pad, pad)))
    L = xp.shape[1]
    n_frames = 1 + (L - n_fft) // hop_length

    idx = (jnp.arange(n_frames)[:, None] * hop_length
           + jnp.arange(n_fft)[None, :])                       # (T, n_fft)
    frames = xp[:, idx] * window[None, None, :]                # (B, T, n_fft)
    spec = jnp.fft.rfft(frames, n=n_fft, axis=-1)
    out = jnp.stack([spec.real, spec.imag], axis=-1)           # (B, T, F, 2)
    return out.astype(jnp.float32)


# ----------------------------------------------------------------------------
# Pallas kernels
# ----------------------------------------------------------------------------
def _slope_power_kernel(w_ref, x_ref, o_ref):
    # x_ref: (BB, T, 2F)  interleaved [re0, im0, re1, im1, ...]
    # w_ref: (1, 1, 2F)   folded weights -> slope = sum_j w[j] * x[j]^2
    x = x_ref[...]
    w = w_ref[...]
    o_ref[...] = jnp.sum((x * x) * w, axis=-1).astype(o_ref.dtype)   # (BB, T)


def _slope_mag_kernel(w_ref, re_ref, im_ref, o_ref):
    # per-bin magnitude spectrum (nonlinear sqrt needs de-interleaved bins),
    # then a weighted lane-reduce with the folded frequency weights.
    re = re_ref[...]
    im = im_ref[...]
    spectr = jnp.sqrt(re * re + im * im + 1e-14)
    w = w_ref[...]                                                    # (1,1,F)
    o_ref[...] = jnp.sum(spectr * w, axis=-1).astype(o_ref.dtype)     # (BB, T)


def _pick_batch_block(B, T, lane_width):
    """Batch rows per grid step.

    Targets ~4 MiB input blocks (amortizes the ~0.35us/step overhead, safe for
    v5e's 16 MiB / v7x's 32 MiB default scoped VMEM with double buffering) and
    keeps the (BB, T) output block 8-row aligned (or == B) for the (8,128)
    tiling rule.  Prefers >= 2 grid steps when B is large so both v7x cores
    are fed.
    """
    target_bytes = 4 * 1024 * 1024
    bytes_per_row = T * lane_width * 4
    bb = max(1, target_bytes // max(1, bytes_per_row))
    if bb >= B:
        bb = B
        if B >= 16:
            bb = min(B, max(8, ((B // 2) + 7) // 8 * 8))
    else:
        bb = min(B, max(8, (bb // 8) * 8))
    if bb != B and bb % 8 != 0:   # safety: output-block row alignment
        bb = B if B <= 8 else 8
    return int(bb)


# ----------------------------------------------------------------------------
# Wrapper (matches SpectralSlope.forward)
# ----------------------------------------------------------------------------
def spectral_slope(x, *, sample_rate=16000, win_length=25, hop_length=10,
                   n_fft=400, spectrum_type="power"):
    """x: (B, time) time-domain signal or (B, T, F, 2) STFT. Returns (B, T, 1)."""
    if x.ndim == 2:
        x = stft_jax(x, sample_rate, win_length, hop_length, n_fft)
    assert x.ndim == 4 and x.shape[-1] == 2
    x = x.astype(jnp.float32)
    B, T, F, _ = x.shape

    # frequency axis + centering (host-side constants; shapes are static)
    n_fft_eff = (F - 1) * 2
    freqs = np.fft.rfftfreq(n_fft_eff, d=1.0 / sample_rate)            # (F,)
    fc = freqs - freqs.mean()
    denom = float(np.sum(fc * fc))
    # fold spectr-mean centering:  sum_f fc[f]*(s[f]-mean) = sum_f (fc[f]-S/F)*s[f]
    w_bin = ((fc - fc.sum() / F) / denom).astype(np.float32)           # (F,)

    BB = _pick_batch_block(B, T, 2 * F)
    grid = (pl.cdiv(B, BB),)
    bytes_per_row = T * 2 * F * 4
    vmem_limit = int(min(max(3 * BB * bytes_per_row + (2 << 20), 16 << 20),
                         56 << 20))
    cparams = pltpu.CompilerParams(dimension_semantics=("parallel",),
                                   vmem_limit_bytes=vmem_limit)

    if spectrum_type == "magnitude":
        # TODO(synk): magnitude mode still splits re/im in the wrapper (extra HBM
        # traffic); the per-bin sqrt prevents the interleaved-weight trick used
        # for the default power path.
        re = x[..., 0]
        im = x[..., 1]
        w = jnp.asarray(w_bin).reshape(1, 1, F)
        out = pl.pallas_call(
            _slope_mag_kernel,
            out_shape=jax.ShapeDtypeStruct((B, T), jnp.float32),
            grid_spec=pltpu.PrefetchScalarGridSpec(
                num_scalar_prefetch=0, grid=grid,
                in_specs=[
                    pl.BlockSpec((1, 1, F), lambda i: (0, 0, 0)),
                    pl.BlockSpec((BB, T, F), lambda i: (i, 0, 0)),
                    pl.BlockSpec((BB, T, F), lambda i: (i, 0, 0)),
                ],
                out_specs=pl.BlockSpec((BB, T), lambda i: (i, 0)),
            ),
            compiler_params=cparams,
        )(w, re, im)
    else:  # "power" (default)
        x2f = x.reshape(B, T, 2 * F)              # free view, no re/im split copy
        w_int = np.repeat(w_bin, 2)               # weight per interleaved lane
        w = jnp.asarray(w_int).reshape(1, 1, 2 * F)
        out = pl.pallas_call(
            _slope_power_kernel,
            out_shape=jax.ShapeDtypeStruct((B, T), jnp.float32),
            grid_spec=pltpu.PrefetchScalarGridSpec(
                num_scalar_prefetch=0, grid=grid,
                in_specs=[
                    pl.BlockSpec((1, 1, 2 * F), lambda i: (0, 0, 0)),
                    pl.BlockSpec((BB, T, 2 * F), lambda i: (i, 0, 0)),
                ],
                out_specs=pl.BlockSpec((BB, T), lambda i: (i, 0)),
            ),
            compiler_params=cparams,
        )(w, x2f)

    return out[..., None]                          # (B, T, 1), free reshape


# ----------------------------------------------------------------------------
# Pure-JAX reference (mirrors the torch module line by line).
# ----------------------------------------------------------------------------
def spectral_slope_ref(x4, sample_rate, spectrum_type="power"):
    power = jnp.sum(x4.astype(jnp.float32) ** 2, axis=-1)              # (B,T,F)
    spectr = jnp.sqrt(power + 1e-14) if spectrum_type == "magnitude" else power
    F = x4.shape[2]
    n_fft = (F - 1) * 2
    freqs = jnp.fft.rfftfreq(n_fft, d=1.0 / sample_rate).astype(jnp.float32)
    freqs = freqs - freqs.mean()
    spectr = spectr - spectr.mean(axis=-1, keepdims=True)
    slope = (jnp.sum(freqs[None, None, :] * spectr, axis=-1, keepdims=True)
             / jnp.sum(freqs ** 2))
    return slope


if __name__ == "__main__":
    key = jax.random.PRNGKey(0)
    k1, k2 = jax.random.split(key)

    # --- frequency-domain path: (batch=2, frames=8, n_fft/2+1=33, 2) ---------
    x_freq = jax.random.normal(k1, (2, 8, 33, 2), dtype=jnp.float32)

    out_p = jax.block_until_ready(spectral_slope(x_freq, sample_rate=16000))
    ref_p = spectral_slope_ref(x_freq, 16000, "power")
    assert out_p.shape == (2, 8, 1)
    np.testing.assert_allclose(np.asarray(out_p), np.asarray(ref_p),
                               rtol=1e-4, atol=1e-6)

    out_m = jax.block_until_ready(
        spectral_slope(x_freq, sample_rate=16000, spectrum_type="magnitude"))
    ref_m = spectral_slope_ref(x_freq, 16000, "magnitude")
    np.testing.assert_allclose(np.asarray(out_m), np.asarray(ref_m),
                               rtol=1e-4, atol=1e-6)

    # --- time-domain path: tiny config (sample_rate=1000 -> win=25, hop=10) --
    # jit the whole pipeline so XLA fuses the STFT framing/window intermediates
    # around the Pallas kernel (review item on the 2-D input path).
    x_time = jax.random.normal(k2, (2, 160), dtype=jnp.float32)
    slope_fn = jax.jit(functools.partial(
        spectral_slope, sample_rate=1000, win_length=25, hop_length=10,
        n_fft=32))
    out_t = jax.block_until_ready(slope_fn(x_time))
    x_stft = stft_jax(x_time, 1000, 25, 10, 32)
    ref_t = spectral_slope_ref(x_stft, 1000, "power")
    assert out_t.shape == (2, x_stft.shape[1], 1)
    np.testing.assert_allclose(np.asarray(out_t), np.asarray(ref_t),
                               rtol=1e-4, atol=1e-5)

    print("KERNEL_OK")
</pallas_src>

<mosaic_0001>
module attributes {stable_mosaic.version = 11 : i64} {
  func.func @_slope_power_kernel(%arg0: i32, %arg1: memref<1x1x66xf32, #tpu.memory_space<vmem>>, %arg2: memref<2x8x66xf32, #tpu.memory_space<vmem>>, %arg3: memref<2x8xf32, #tpu.memory_space<vmem>>) attributes {dimension_semantics = [#tpu.dimension_semantics<parallel>], iteration_bounds = array<i64: 1>, scalar_prefetch = 0 : i64, scratch_operands = 0 : i64, tpu.core_type = #tpu.core_type<tc>, window_params = [{pipeline_mode = #tpu.pipeline_mode<synchronous>, transform_indices = @transform_0, window_bounds = array<i64: 1, 1, 66>}, {transform_indices = @transform_1, window_bounds = array<i64: 2, 8, 66>}, {transform_indices = @transform_2, window_bounds = array<i64: 2, 8>}]} {
    %c0 = arith.constant 0 : index
    %c0_0 = arith.constant 0 : index
    %c0_1 = arith.constant 0 : index
    %0 = vector.load %arg2[%c0, %c0_0, %c0_1] : memref<2x8x66xf32, #tpu.memory_space<vmem>>, vector<2x8x66xf32>
    %c0_2 = arith.constant 0 : index
    %c0_3 = arith.constant 0 : index
    %c0_4 = arith.constant 0 : index
    %1 = vector.load %arg1[%c0_2, %c0_3, %c0_4] : memref<1x1x66xf32, #tpu.memory_space<vmem>>, vector<1x1x66xf32>
    %2 = arith.mulf %0, %0 : vector<2x8x66xf32>
    %3 = vector.broadcast %1 : vector<1x1x66xf32> to vector<2x8x66xf32>
    %4 = arith.mulf %2, %3 : vector<2x8x66xf32>
    %cst = arith.constant dense<0.000000e+00> : vector<2x8xf32>
    %5 = vector.multi_reduction <add>, %4, %cst [2] : vector<2x8x66xf32> to vector<2x8xf32>
    %c0_5 = arith.constant 0 : index
    %c0_6 = arith.constant 0 : index
    %6 = vector.load %arg3[%c0_5, %c0_6] : memref<2x8xf32, #tpu.memory_space<vmem>>, vector<2x8xf32>
    tpu.vector_store %arg3[%c0_5, %c0_6], %5 {strides = array<i32>} : memref<2x8xf32, #tpu.memory_space<vmem>>, vector<2x8xf32>,
    return
  }
  func.func @transform_0(%arg0: i32) -> (i32, i32, i32) {
    %c0_i32 = arith.constant 0 : i32
    %c0_i32_0 = arith.constant 0 : i32
    %c0_i32_1 = arith.constant 0 : i32
    %c0_i32_2 = arith.constant 0 : i32
    return %c0_i32, %c0_i32_0, %c0_i32_1 : i32, i32, i32
  }
  func.func @transform_1(%arg0: i32) -> (i32, i32, i32) {
    %c0_i32 = arith.constant 0 : i32
    %c0_i32_0 = arith.constant 0 : i32
    %c0_i32_1 = arith.constant 0 : i32
    return %arg0, %c0_i32, %c0_i32_0 : i32, i32, i32
  }
  func.func @transform_2(%arg0: i32) -> (i32, i32) {
    %c0_i32 = arith.constant 0 : i32
    %c0_i32_0 = arith.constant 0 : i32
    return %arg0, %c0_i32 : i32, i32
  }
}

</mosaic_0001>

<llo_original>
// kernel: tpu_custom_call.1
$region0: #{tpu_custom_call.1}
  #allocation0 [shape = 'u32[]', space=smem, size = 0x4, offset = 0x4, fixed_abs, tag = 'smem constant byte address 0x4 - core index']
  #allocation1 [shape = 'u32[144,128]{1,0:T(1,128)}', space=vmem, size = 0x12000, scoped, tag = 'internal scratch']
  %s0 = inlined_call_operand.hbm [shape: f32[1,1,66], index: 0, kind: input, shape index: {}]
  %s1 = inlined_call_operand.hbm [shape: f32[2,8,66], index: 1, kind: input, shape index: {}]
  %s2 = inlined_call_operand.hbm [shape: f32[2,8], index: 2, kind: output, shape index: {}]
  %s3 = sld [smem:[#allocation0]]
  $region26: #{tpu_custom_call.1} parent=0
    _
  %s5 = ssub.s32 1, %s3
  %s6 = scalar_select 0, %s5, %s3
  $region1: #{tpu_custom_call.1} parent=0
    #allocation2 [shape = 'u8[512]{0}', space=vmem, size = 0x400, scoped, tag = 'input window, operand 0, single buffered']
    #allocation3 [shape = 's32[1]{0}', space=sflag, size = 0x4, scoped, tag = 'scoped memory for tpu_custom_call.1']
    #allocation4 [shape = 's32[1]{0}', space=sflag, size = 0x4, scoped, tag = 'scoped memory for tpu_custom_call.1']
    #allocation5 [shape = 'u8[8192]{0}', space=vmem, size = 0x2000, scoped, tag = 'input window, operand 1, single buffered']
    #allocation6 [shape = 's32[1]{0}', space=sflag, size = 0x4, scoped, tag = 'scoped memory for tpu_custom_call.1']
    #allocation7 [shape = 'u8[1024]{0}', space=vmem, size = 0x400, scoped, tag = 'output window, operand 0, single buffered']
    %7 = vsyncpa [#allocation3], 0
    %8 = vsyncpa [#allocation6], 0
    %9 = vsyncpa [#allocation4], 0
    // Predicated region
    $region2: #{tpu_custom_call.1} parent=1 // pred_check
      _
    $region3: #{tpu_custom_call.1} parent=1 // pred_check_branch
      %11 = sbr.rel (0) target = $region5
    $region4: #{tpu_custom_call.1} parent=1 // pred_region
      %s13 = ssub.s32 16, 16
      %14 = vsyncadd [#allocation3], %s13
      %s16 = sshll.u32 [#allocation2], 4
      %s17 = int_to_ptr.vmem [resolvable:$true] %s16
      %19 = dma.hbm_to_vmem [thread:$0]  %s0, 16, %s17, [#allocation3]
    $region5: #{tpu_custom_call.1} parent=1 // pred_fallthru
      _
    // Predicated region
    $region6: #{tpu_custom_call.1} parent=1 // pred_check
      _
    $region7: #{tpu_custom_call.1} parent=1 // pred_check_branch
      %21 = sbr.rel (0) target = $region9
    $region8: #{tpu_custom_call.1} parent=1 // pred_region
      %s23 = ssub.s32 256, 256
      %24 = vsyncadd [#allocation6], %s23
      %s25 = sshll.u32 [#allocation5], 4
      %s26 = int_to_ptr.vmem [resolvable:$true] %s25
      %31 = dma.hbm_to_vmem [thread:$0]  %s1, 256, %s26, [#allocation6], 128, 128, 8
    $region9: #{tpu_custom_call.1} parent=1 // pred_fallthru
      _
    // Predicated region
    $region10: #{tpu_custom_call.1} parent=1 // pred_check
      _
    $region11: #{tpu_custom_call.1} parent=1 // pred_check_branch
      %33 = sbr.rel (0) target = $region13
    $region12: #{tpu_custom_call.1} parent=1 // pred_region
      %34 = dma.done [#allocation3], 16
    $region13: #{tpu_custom_call.1} parent=1 // pred_fallthru
      _
    // Predicated region
    $region14: #{tpu_custom_call.1} parent=1 // pred_check
      _
    $region15: #{tpu_custom_call.1} parent=1 // pred_check_branch
      %36 = sbr.rel (0) target = $region17
    $region16: #{tpu_custom_call.1} parent=1 // pred_region
      %37 = dma.done [#allocation6], 256
    $region17: #{tpu_custom_call.1} parent=1 // pred_fallthru
      _
    %v38 = vld [vmem:[#allocation5] sm:$0xff]
    %v39 = vld [vmem:[#allocation5 + $0x8] sm:$0xff]
    %v40 = vld [vmem:[#allocation2] sm:$0x1]
    %v41 = vmul.f32 %v38, %v38
    %v42 = vmul.f32 %v39, %v39
    %v44 = vlaneseq
    %v45 = vshrl.u32 %v44, 7
    %v46 = vsub.s32 0, %v45
    %v47 = vrot.slane %v40, %v46
    %v49 = vmul.f32 %v41, %v47
    %v50 = vmul.f32 %v42, %v47
    %vm51 = vcmask 539648
    %v52 = vsel %vm51, %v49, 0.0
    %53 = vadd.xlane.f32.xlu0 %v52
    %v54 = vpop.xlane.xlu0 %53
    %v55 = vsel %vm51, %v50, 0.0
    %56 = vadd.xlane.f32.xlu0 %v55
    %v57 = vpop.xlane.xlu0 %56
    %v60 = vlaneseq
    %v61 = vand.u32 %v60, 127
    %v62 = vlaneseq
    %v63 = vshrl.u32 %v62, 7
    %v64 = vsub.s32 %v61, %v63
    %v65 = vrot.slane %v54, %v64
    %v66 = vlaneseq
    %v67 = vshrl.u32 %v66, 7
    %v68 = vsub.s32 %v61, %v67
    %v69 = vrot.slane %v57, %v68
    %vm70 = vcmask 1041409
    %v71 = vsel %vm70, %v69, %v65
    %vm73 = vcmask 58368
    %74 = vst.msk [vmem:[#allocation7] sm:$0x3] %vm73, %v71
    // Predicated region
    $region18: #{tpu_custom_call.1} parent=1 // pred_check
      _
    $region19: #{tpu_custom_call.1} parent=1 // pred_check_branch
      %76 = sbr.rel (0) target = $region21
    $region20: #{tpu_custom_call.1} parent=1 // pred_region
      %s78 = ssub.s32 32, 32
      %79 = vsyncadd [#allocation4], %s78
      %s81 = sshll.u32 [#allocation7], 4
      %s82 = int_to_ptr.vmem [resolvable:$true] %s81
      %84 = dma.vmem_to_hbm [thread:$0]  %s82, 32, %s2, [#allocation4]
    $region21: #{tpu_custom_call.1} parent=1 // pred_fallthru
      _
    // Predicated region
    $region22: #{tpu_custom_call.1} parent=1 // pred_check
      _
    $region23: #{tpu_custom_call.1} parent=1 // pred_check_branch
      %86 = sbr.rel (0) target = $region25
    $region24: #{tpu_custom_call.1} parent=1 // pred_region
      %87 = dma.done [#allocation4], 32
    $region25: #{tpu_custom_call.1} parent=1 // pred_fallthru
      _
    %88 = vsyncpa [#allocation3], 1
    %89 = vsyncpa [#allocation6], 1
    %90 = vsyncpa [#allocation4], 1

</llo_original>
